<compile_context>
chip_gen: v5e
topology: v5e:2x2
jax: 0.10.0
libtpu: 0.0.40
codegen_flags: <defaults>
</compile_context>

<pallas_src>
import jax
import jax.numpy as jnp
from jax.experimental import pallas as pl
from jax.experimental.pallas import tpu as pltpu


def _round_up(n, m):
    return ((n + m - 1) // m) * m


# ----------------------------------------------------------------------------- kernel
def _fused_mlp_kernel(s_ref, x_ref, w1_ref, b1_ref, w2_ref, b2_ref, w3_ref, b3_ref,
                      o_ref):
    # s_ref: (1,) SMEM scalar; x_ref: (tm, K) tile; w*_ref: full bf16 weights resident
    # in VMEM (single-buffered); b*_ref: (1, N) f32 bias rows; o_ref: (tm, N_out) tile.
    scale = s_ref[0]                                    # hoisted scalar read

    x = x_ref[...].astype(jnp.bfloat16)                 # bf16 MXU inputs, f32 accum
    h = jnp.dot(x, w1_ref[...], preferred_element_type=jnp.float32)
    h = jnp.maximum(h + b1_ref[...], 0.0) * scale       # ReLU before scale (matches ref)

    h = jnp.dot(h.astype(jnp.bfloat16), w2_ref[...], preferred_element_type=jnp.float32)
    h = (h + b2_ref[...]) * scale

    h = jnp.dot(h.astype(jnp.bfloat16), w3_ref[...], preferred_element_type=jnp.float32)
    o_ref[...] = (h + b3_ref[...]).astype(o_ref.dtype)


def fused_scaled_mlp(x, scale, w1, b1, w2, b2, w3, b3, *,
                     tile_m=1024, out_dtype=None, core_parallel=False):
    """out = (((relu(x@w1+b1)*s) @ w2 + b2) * s) @ w3 + b3, in ONE pallas_call."""
    M, K = x.shape
    H1 = w1.shape[1]
    H2 = w2.shape[1]
    N = w3.shape[1]
    out_dtype = x.dtype if out_dtype is None else out_dtype

    # ---- M tiling: large tile (amortizes ~0.35us/step), 16-row aligned (bf16 sublane
    # packing), near-minimal padding, and >=2 grid steps when M allows (v7x 2 TCs).
    n_steps = max(1, pl.cdiv(M, tile_m))
    tm = _round_up(pl.cdiv(M, n_steps), 16)
    if _round_up(M, tm) // tm < 2 and M >= 32:
        tm = _round_up(pl.cdiv(M, 2), 16)
    Mp = _round_up(M, tm)
    grid_m = Mp // tm
    assert tm % 16 == 0 and Mp % tm == 0

    xp = x if Mp == M else jnp.pad(x, ((0, Mp - M), (0, 0)))   # remainder handling

    # ---- VMEM budget (weights single-buffered; x/out tiles double-buffered by Pallas)
    xb = xp.dtype.itemsize
    ob = jnp.dtype(out_dtype).itemsize
    weight_bytes = (w1.size * w1.dtype.itemsize + w2.size * w2.dtype.itemsize
                    + w3.size * w3.dtype.itemsize
                    + (b1.size + b2.size + b3.size) * 4)
    act_bytes = 2 * tm * (K * xb + N * ob)
    interm_bytes = 3 * tm * max(H1, H2) * 4
    vmem_limit = int(min(max(2 * (weight_bytes + act_bytes + interm_bytes), 32 << 20),
                         48 << 20))

    flops = 2 * Mp * (K * H1 + H1 * H2 + H2 * N)
    bytes_accessed = (xp.size * xb + weight_bytes + Mp * N * ob)

    msem = pltpu.CORE_PARALLEL if core_parallel else pltpu.PARALLEL

    out = pl.pallas_call(
        _fused_mlp_kernel,
        out_shape=jax.ShapeDtypeStruct((Mp, N), out_dtype),
        grid=(grid_m,),
        in_specs=[
            pl.BlockSpec(memory_space=pltpu.MemorySpace.SMEM),   # scalar scale
            pl.BlockSpec((tm, K), lambda i: (i, 0)),             # x tile (pipelined)
            pl.BlockSpec(memory_space=pltpu.MemorySpace.VMEM),   # W1 resident, 1-buffered
            pl.BlockSpec(memory_space=pltpu.MemorySpace.VMEM),   # b1
            pl.BlockSpec(memory_space=pltpu.MemorySpace.VMEM),   # W2
            pl.BlockSpec(memory_space=pltpu.MemorySpace.VMEM),   # b2
            pl.BlockSpec(memory_space=pltpu.MemorySpace.VMEM),   # W3
            pl.BlockSpec(memory_space=pltpu.MemorySpace.VMEM),   # b3
        ],
        out_specs=pl.BlockSpec((tm, N), lambda i: (i, 0)),
        compiler_params=pltpu.CompilerParams(
            dimension_semantics=(msem,),
            vmem_limit_bytes=vmem_limit),
        cost_estimate=pl.CostEstimate(
            flops=flops, transcendentals=0, bytes_accessed=bytes_accessed),
    )(scale, xp, w1, b1, w2, b2, w3, b3)

    return out[:M] if Mp != M else out


# ------------------------------------------------------------------ constituent modules
def _init_linear(key, in_dim, out_dim):
    kw, kb = jax.random.split(key)
    w = (jax.random.normal(kw, (in_dim, out_dim), jnp.float32)
         / (in_dim ** 0.5)).astype(jnp.bfloat16)                    # bf16 weights in HBM
    b = 0.01 * jax.random.normal(kb, (1, out_dim), jnp.float32)     # f32 bias
    return w, b


class PallasFusedScaledMLP:
    """(x, scale) -> (mlp(x, scale), scale)   [tuple in, tuple out]

    The whole L1->ReLU->scale->L2->scale->L3 chain runs in a single Pallas kernel.
    """

    def __init__(self, k1, k2, k3, in_dim, hidden_dim, out_dim):
        self.w1, self.b1 = _init_linear(k1, in_dim, hidden_dim)
        self.w2, self.b2 = _init_linear(k2, hidden_dim, hidden_dim)
        self.w3, self.b3 = _init_linear(k3, hidden_dim, out_dim)

    def __call__(self, x, scale):
        y = fused_scaled_mlp(x, scale, self.w1, self.b1, self.w2, self.b2,
                             self.w3, self.b3)
        return y, scale


class TakeFirst:
    """(y, scale) -> y   [tuple in, single out] — pure control flow, no compute."""

    def __call__(self, y, scale):
        return y


class Identity:
    """y -> y   [single in, single out] — pure control flow, no compute."""

    def __call__(self, y):
        return y


# ----------------------------------------------------------- TupleSequential (verbatim)
class TupleSequential:
    """Faithful port of the PyTorch container's forward() control flow."""

    def __init__(self, *modules):
        self.module_list = list(modules)

    def __call__(self, *args):
        for mod in self.module_list:
            if type(args) is tuple:
                args = mod(*args)
            else:
                args = mod(args)
        return args

    def __getitem__(self, idx):
        return self.module_list[idx]


# --------------------------------------------------------------------------------- main
if __name__ == "__main__":
    key = jax.random.PRNGKey(0)
    kx, k1, k2, k3 = jax.random.split(key, 4)

    # Small but representative shapes: M = B*S = 64 rows (so the grid actually has 2
    # pipelined / parallel steps), feature dims multiples of 128.
    B, S, H, H2 = 4, 16, 128, 256
    # bf16 activations "from the upstream op" — no wrapper cast / extra HBM round-trip.
    x = jax.random.normal(kx, (B, S, H), jnp.float32).astype(jnp.bfloat16)
    scale = jnp.array([0.5], jnp.float32)

    net = TupleSequential(
        PallasFusedScaledMLP(k1, k2, k3, H, H2, H),   # tuple -> tuple  (ONE pallas_call)
        TakeFirst(),                                  # tuple -> single (control flow)
        Identity(),                                   # single -> single (control flow)
    )

    x2d = x.reshape(B * S, H)                         # glue: flatten (B, S) onto M
    out2d = net(x2d, scale)
    out = jax.block_until_ready(out2d.reshape(B, S, H))

    # Pure-JAX f32 reference from the same bf16 inputs/weights.  Intentional precision
    # trade-off: the kernel keeps inter-layer activations and the output in bf16, so a
    # loose tolerance is used against the all-f32 reference.
    m = net[0]
    xf = x2d.astype(jnp.float32)
    w1f, w2f, w3f = (m.w1.astype(jnp.float32), m.w2.astype(jnp.float32),
                     m.w3.astype(jnp.float32))
    h = jnp.maximum(xf @ w1f + m.b1, 0.0) * scale[0]
    h = (h @ w2f + m.b2) * scale[0]
    ref = (h @ w3f + m.b3).reshape(B, S, H)

    assert out.shape == (B, S, H) and out.dtype == jnp.bfloat16
    assert jnp.allclose(out.astype(jnp.float32), ref, atol=3e-2, rtol=3e-2)
    print("KERNEL_OK")
</pallas_src>

<mosaic_0001>
module attributes {stable_mosaic.version = 11 : i64} {
  func.func @_fused_mlp_kernel(%arg0: i32, %arg1: memref<1xf32, #tpu.memory_space<smem>>, %arg2: memref<32x128xbf16, #tpu.memory_space<vmem>>, %arg3: memref<128x256xbf16, #tpu.memory_space<vmem>>, %arg4: memref<1x256xf32, #tpu.memory_space<vmem>>, %arg5: memref<256x256xbf16, #tpu.memory_space<vmem>>, %arg6: memref<1x256xf32, #tpu.memory_space<vmem>>, %arg7: memref<256x128xbf16, #tpu.memory_space<vmem>>, %arg8: memref<1x128xf32, #tpu.memory_space<vmem>>, %arg9: memref<32x128xbf16, #tpu.memory_space<vmem>>) attributes {dimension_semantics = [#tpu.dimension_semantics<parallel>], iteration_bounds = array<i64: 2>, scalar_prefetch = 0 : i64, scratch_operands = 0 : i64, tpu.core_type = #tpu.core_type<tc>, window_params = [{transform_indices = @transform_0, window_bounds = array<i64: 1>}, {transform_indices = @transform_1, window_bounds = array<i64: 32, 128>}, {pipeline_mode = #tpu.pipeline_mode<synchronous>, transform_indices = @transform_2, window_bounds = array<i64: 128, 256>}, {pipeline_mode = #tpu.pipeline_mode<synchronous>, transform_indices = @transform_3, window_bounds = array<i64: 1, 256>}, {pipeline_mode = #tpu.pipeline_mode<synchronous>, transform_indices = @transform_4, window_bounds = array<i64: 256, 256>}, {pipeline_mode = #tpu.pipeline_mode<synchronous>, transform_indices = @transform_5, window_bounds = array<i64: 1, 256>}, {pipeline_mode = #tpu.pipeline_mode<synchronous>, transform_indices = @transform_6, window_bounds = array<i64: 256, 128>}, {pipeline_mode = #tpu.pipeline_mode<synchronous>, transform_indices = @transform_7, window_bounds = array<i64: 1, 128>}, {transform_indices = @transform_8, window_bounds = array<i64: 32, 128>}]} {
    %c0 = arith.constant 0 : index
    %0 = memref.load %arg1[%c0] : memref<1xf32, #tpu.memory_space<smem>>
    %c0_0 = arith.constant 0 : index
    %c0_1 = arith.constant 0 : index
    %1 = vector.load %arg2[%c0_0, %c0_1] : memref<32x128xbf16, #tpu.memory_space<vmem>>, vector<32x128xbf16>
    %c0_2 = arith.constant 0 : index
    %c0_3 = arith.constant 0 : index
    %2 = vector.load %arg3[%c0_2, %c0_3] : memref<128x256xbf16, #tpu.memory_space<vmem>>, vector<128x256xbf16>
    %cst = arith.constant dense<0.000000e+00> : vector<32x256xf32>
    %3 = tpu.matmul %1, %2, %cst {dimension_numbers = #tpu.dot_dimension_numbers<[1], [0], [0], [1], [0, 0, 1, 1], [], []>} : vector<32x128xbf16>, vector<128x256xbf16>, vector<32x256xf32> -> vector<32x256xf32>
    %c0_4 = arith.constant 0 : index
    %c0_5 = arith.constant 0 : index
    %4 = vector.load %arg4[%c0_4, %c0_5] : memref<1x256xf32, #tpu.memory_space<vmem>>, vector<1x256xf32>
    %5 = vector.broadcast %4 : vector<1x256xf32> to vector<32x256xf32>
    %6 = arith.addf %3, %5 : vector<32x256xf32>
    %cst_6 = arith.constant 0.000000e+00 : f32
    %7 = vector.broadcast %cst_6 : f32 to vector<32x256xf32>
    %8 = arith.maximumf %6, %7 : vector<32x256xf32>
    %9 = vector.broadcast %0 : f32 to vector<32x256xf32>
    %10 = arith.mulf %8, %9 : vector<32x256xf32>
    %11 = arith.truncf %10 : vector<32x256xf32> to vector<32x256xbf16>
    %c0_7 = arith.constant 0 : index
    %c0_8 = arith.constant 0 : index
    %12 = vector.load %arg5[%c0_7, %c0_8] : memref<256x256xbf16, #tpu.memory_space<vmem>>, vector<256x256xbf16>
    %cst_9 = arith.constant dense<0.000000e+00> : vector<32x256xf32>
    %13 = tpu.matmul %11, %12, %cst_9 {dimension_numbers = #tpu.dot_dimension_numbers<[1], [0], [0], [1], [0, 0, 1, 1], [], []>} : vector<32x256xbf16>, vector<256x256xbf16>, vector<32x256xf32> -> vector<32x256xf32>
    %c0_10 = arith.constant 0 : index
    %c0_11 = arith.constant 0 : index
    %14 = vector.load %arg6[%c0_10, %c0_11] : memref<1x256xf32, #tpu.memory_space<vmem>>, vector<1x256xf32>
    %15 = vector.broadcast %14 : vector<1x256xf32> to vector<32x256xf32>
    %16 = arith.addf %13, %15 : vector<32x256xf32>
    %17 = vector.broadcast %0 : f32 to vector<32x256xf32>
    %18 = arith.mulf %16, %17 : vector<32x256xf32>
    %19 = arith.truncf %18 : vector<32x256xf32> to vector<32x256xbf16>
    %c0_12 = arith.constant 0 : index
    %c0_13 = arith.constant 0 : index
    %20 = vector.load %arg7[%c0_12, %c0_13] : memref<256x128xbf16, #tpu.memory_space<vmem>>, vector<256x128xbf16>
    %cst_14 = arith.constant dense<0.000000e+00> : vector<32x128xf32>
    %21 = tpu.matmul %19, %20, %cst_14 {dimension_numbers = #tpu.dot_dimension_numbers<[1], [0], [0], [1], [0, 0, 1, 1], [], []>} : vector<32x256xbf16>, vector<256x128xbf16>, vector<32x128xf32> -> vector<32x128xf32>
    %c0_15 = arith.constant 0 : index
    %c0_16 = arith.constant 0 : index
    %22 = vector.load %arg8[%c0_15, %c0_16] : memref<1x128xf32, #tpu.memory_space<vmem>>, vector<1x128xf32>
    %23 = vector.broadcast %22 : vector<1x128xf32> to vector<32x128xf32>
    %24 = arith.addf %21, %23 : vector<32x128xf32>
    %25 = arith.truncf %24 : vector<32x128xf32> to vector<32x128xbf16>
    %c0_17 = arith.constant 0 : index
    %c0_18 = arith.constant 0 : index
    %26 = vector.load %arg9[%c0_17, %c0_18] : memref<32x128xbf16, #tpu.memory_space<vmem>>, vector<32x128xbf16>
    tpu.vector_store %arg9[%c0_17, %c0_18], %25 {strides = array<i32>} : memref<32x128xbf16, #tpu.memory_space<vmem>>, vector<32x128xbf16>,
    return
  }
  func.func @transform_0(%arg0: i32) -> i32 {
    %c0_i32 = arith.constant 0 : i32
    %c0_i32_0 = arith.constant 0 : i32
    return %c0_i32 : i32
  }
  func.func @transform_1(%arg0: i32) -> (i32, i32) {
    %c0_i32 = arith.constant 0 : i32
    %c0_i32_0 = arith.constant 0 : i32
    return %arg0, %c0_i32 : i32, i32
  }
  func.func @transform_2(%arg0: i32) -> (i32, i32) {
    %c0_i32 = arith.constant 0 : i32
    %c0_i32_0 = arith.constant 0 : i32
    %c0_i32_1 = arith.constant 0 : i32
    return %c0_i32, %c0_i32_0 : i32, i32
  }
  func.func @transform_3(%arg0: i32) -> (i32, i32) {
    %c0_i32 = arith.constant 0 : i32
    %c0_i32_0 = arith.constant 0 : i32
    %c0_i32_1 = arith.constant 0 : i32
    return %c0_i32, %c0_i32_0 : i32, i32
  }
  func.func @transform_4(%arg0: i32) -> (i32, i32) {
    %c0_i32 = arith.constant 0 : i32
    %c0_i32_0 = arith.constant 0 : i32
    %c0_i32_1 = arith.constant 0 : i32
    return %c0_i32, %c0_i32_0 : i32, i32
  }
  func.func @transform_5(%arg0: i32) -> (i32, i32) {
    %c0_i32 = arith.constant 0 : i32
    %c0_i32_0 = arith.constant 0 : i32
    %c0_i32_1 = arith.constant 0 : i32
    return %c0_i32, %c0_i32_0 : i32, i32
  }
  func.func @transform_6(%arg0: i32) -> (i32, i32) {
    %c0_i32 = arith.constant 0 : i32
    %c0_i32_0 = arith.constant 0 : i32
    %c0_i32_1 = arith.constant 0 : i32
    return %c0_i32, %c0_i32_0 : i32, i32
  }
  func.func @transform_7(%arg0: i32) -> (i32, i32) {
    %c0_i32 = arith.constant 0 : i32
    %c0_i32_0 = arith.constant 0 : i32
    %c0_i32_1 = arith.constant 0 : i32
    return %c0_i32, %c0_i32_0 : i32, i32
  }
  func.func @transform_8(%arg0: i32) -> (i32, i32) {
    %c0_i32 = arith.constant 0 : i32
    %c0_i32_0 = arith.constant 0 : i32
    return %arg0, %c0_i32 : i32, i32
  }
}

</mosaic_0001>

<llo_original>
// kernel: tpu_custom_call.1
$region0: #{tpu_custom_call.1}
  #allocation0 [shape = 'u32[]', space=smem, size = 0x4, offset = 0x4, fixed_abs, tag = 'smem constant byte address 0x4 - core index']
  #allocation1 [shape = 'u32[72,128]{1,0:T(1,128)}', space=vmem, size = 0x9000, scoped, tag = 'internal scratch']
  #allocation2 [shape = 'f32[1]{0:T(128)S(6)}', space=smem, size = 0x200, scoped, tag = 'scoped memory for tpu_custom_call.1']
  %s0 = inlined_call_operand.<no memory space> [shape: f32[1], index: 0, kind: input, shape index: {}]
  %s1 = inlined_call_operand.hbm [shape: bf16[64,128], index: 1, kind: input, shape index: {}]
  %s2 = inlined_call_operand.hbm [shape: bf16[128,256], index: 2, kind: input, shape index: {}]
  %s3 = inlined_call_operand.vmem [shape: f32[1,256], index: 3, kind: input, shape index: {}]
  %s4 = inlined_call_operand.hbm [shape: bf16[256,256], index: 4, kind: input, shape index: {}]
  %s5 = inlined_call_operand.vmem [shape: f32[1,256], index: 5, kind: input, shape index: {}]
  %s6 = inlined_call_operand.hbm [shape: bf16[256,128], index: 6, kind: input, shape index: {}]
  %s7 = inlined_call_operand.vmem [shape: f32[1,128], index: 7, kind: input, shape index: {}]
  %s8 = inlined_call_operand.hbm [shape: bf16[64,128], index: 8, kind: output, shape index: {}]
  %s9 = sld [smem:[#allocation0]]
  $region81: #{tpu_custom_call.1} parent=0
    _
  %s11 = ssub.s32 1, %s9
  %s12 = scalar_select 0, %s11, %s9
  %13 = sst [smem:[#allocation2]] %s0
  $region1: #{tpu_custom_call.1} parent=0
    #allocation3 [shape = 'u8[16384]{0}', space=vmem, size = 0x4000, scoped, tag = 'input window, operand 1']
    #allocation4 [shape = 's32[2]{0}', space=sflag, size = 0x8, scoped, tag = 'scoped memory for tpu_custom_call.1']
    #allocation5 [shape = 's32[2]{0}', space=sflag, size = 0x8, scoped, tag = 'scoped memory for tpu_custom_call.1']
    #allocation6 [shape = 'u8[65536]{0}', space=vmem, size = 0x10000, scoped, tag = 'input window, operand 2, single buffered']
    #allocation7 [shape = 's32[1]{0}', space=sflag, size = 0x4, scoped, tag = 'scoped memory for tpu_custom_call.1']
    #allocation8 [shape = 'u8[131072]{0}', space=vmem, size = 0x20000, scoped, tag = 'input window, operand 4, single buffered']
    #allocation9 [shape = 'u8[65536]{0}', space=vmem, size = 0x10000, scoped, tag = 'input window, operand 6, single buffered']
    #allocation10 [shape = 's32[1]{0}', space=sflag, size = 0x4, scoped, tag = 'scoped memory for tpu_custom_call.1']
    #allocation11 [shape = 'u8[16384]{0}', space=vmem, size = 0x4000, scoped, tag = 'output window, operand 0']
    %14 = vsyncpa [#allocation4], 0
    %s15 = scalar_lea.sflag [#allocation4], 1
    %16 = vsyncpa %s15, 0
    %17 = vsyncpa [#allocation7], 0
    %18 = vsyncpa [#allocation10], 0
    %19 = vsyncpa [#allocation5], 0
    %s20 = scalar_lea.sflag [#allocation5], 1
    %21 = vsyncpa %s20, 0
    loop: start=0, step=1, limit=4
    $region2: #{tpu_custom_call.1} parent=1 // loop_pre_header
      _
    $region3: #{tpu_custom_call.1} parent=1 // loop_header
      %s23 = sphi 0, %s27
      %p24 = scmp.ge.s32.totalorder %s23, 4
      %s31 = sphi 0, %s31
      %s33 = sphi 0, %s31
      %s34 = sphi 0, %s33
      %s48 = sphi 0, %s34
      %s54 = sphi 0, %s56
      %s57 = sphi 0, %s54
      %s58 = sphi 0, %s57
      %s74 = sphi 0, %s58
      %s78 = sphi 0, %s78
      %s80 = sphi 0, %s78
      %s81 = sphi 0, %s80
      %s95 = sphi 0, %s81
      %s99 = sphi 0, %s99
      %s101 = sphi 0, %s99
      %s102 = sphi 0, %s101
      %s116 = sphi 0, %s102
      %s120 = sphi 0, %s120
      %s122 = sphi 0, %s120
      %s123 = sphi 0, %s122
      %s137 = sphi 0, %s123
      %s141 = sphi 0, %s141
      %s143 = sphi 0, %s141
      %s144 = sphi 0, %s143
      %s158 = sphi 0, %s144
      %s162 = sphi 0, %s162
      %s164 = sphi 0, %s162
      %s165 = sphi 0, %s164
      %s179 = sphi 0, %s165
      %s183 = sphi 0, %s183
      %s185 = sphi 0, %s183
      %s186 = sphi 0, %s185
      %s200 = sphi 0, %s186
      %s206 = sphi 0, %s208
      %s209 = sphi 0, %s206
      %s210 = sphi 0, %s209
      %s226 = sphi 0, %s210
    $region4: #{tpu_custom_call.1} parent=1 // loop_header_branch
      %26 = sbr.rel (%p24) target = $region8
    $region5: #{tpu_custom_call.1} parent=1 // loop_body
      %s28 = ssub.s32 %s23, 1
      %s29 = ssub.s32 %s23, 2
      %s30 = sadd.s32 %s23, 1
      %s32 = sadd.s32 %s31, 1
      %p35 = scmp.eq.s32.totalorder %s23, 1
      %p36 = scmp.ne.s32.totalorder %s31, %s33
      %p37 = scmp.eq.s32.totalorder %s23, 0
      %p38 = por %p36, %p37
      %p39 = scmp.ne.s32.totalorder %s31, %s33
      %p40 = scmp.eq.s32.totalorder %s28, 1
      %p41 = por %p39, %p40
      %p42 = scmp.ne.s32.totalorder %s33, %s34
      %p43 = scmp.eq.s32.totalorder %s28, 0
      %p44 = por %p42, %p43
      %p45 = scmp.ne.s32.totalorder %s33, %s34
      %p46 = scmp.eq.s32.totalorder %s29, 1
      %p47 = por %p45, %p46
      %p49 = scmp.ne.s32.totalorder %s34, %s48
      %p50 = scmp.eq.s32.totalorder %s29, 0
      %p51 = por %p49, %p50
      %s52 = ssub.s32 %s23, %s30
      %p53 = scmp.eq.s32.totalorder %s52, 0
      %s55 = sadd.s32 %s54, 1
      %s56 = scalar_select %p53, %s54, %s55
      %p59 = pneg %p53
      %p60 = scmp.eq.s32.totalorder %s23, 1
      %p61 = por %p59, %p60
      %p62 = scmp.ne.s32.totalorder %s54, %s57
      %p63 = scmp.eq.s32.totalorder %s23, 0
      %p64 = por %p62, %p63
      %p65 = scmp.ne.s32.totalorder %s54, %s57
      %p66 = scmp.eq.s32.totalorder %s28, 1
      %p67 = por %p65, %p66
      %p68 = scmp.ne.s32.totalorder %s57, %s58
      %p69 = scmp.eq.s32.totalorder %s28, 0
      %p70 = por %p68, %p69
      %p71 = scmp.ne.s32.totalorder %s57, %s58
      %p72 = scmp.eq.s32.totalorder %s29, 1
      %p73 = por %p71, %p72
      %p75 = scmp.ne.s32.totalorder %s58, %s74
      %p76 = scmp.eq.s32.totalorder %s29, 0
      %p77 = por %p75, %p76
      %s79 = sadd.s32 %s78, 1
      %p82 = scmp.eq.s32.totalorder %s23, 1
      %p83 = scmp.ne.s32.totalorder %s78, %s80
      %p84 = scmp.eq.s32.totalorder %s23, 0
      %p85 = por %p83, %p84
      %p86 = scmp.ne.s32.totalorder %s78, %s80
      %p87 = scmp.eq.s32.totalorder %s28, 1
      %p88 = por %p86, %p87
      %p89 = scmp.ne.s32.totalorder %s80, %s81
      %p90 = scmp.eq.s32.totalorder %s28, 0
      %p91 = por %p89, %p90
      %p92 = scmp.ne.s32.totalorder %s80, %s81
      %p93 = scmp.eq.s32.totalorder %s29, 1
      %p94 = por %p92, %p93
      %p96 = scmp.ne.s32.totalorder %s81, %s95
      %p97 = scmp.eq.s32.totalorder %s29, 0
      %p98 = por %p96, %p97
      %s100 = sadd.s32 %s99, 1
      %p103 = scmp.eq.s32.totalorder %s23, 1
      %p104 = scmp.ne.s32.totalorder %s99, %s101
      %p105 = scmp.eq.s32.totalorder %s23, 0
      %p106 = por %p104, %p105
      %p107 = scmp.ne.s32.totalorder %s99, %s101
      %p108 = scmp.eq.s32.totalorder %s28, 1
      %p109 = por %p107, %p108
      %p110 = scmp.ne.s32.totalorder %s101, %s102
      %p111 = scmp.eq.s32.totalorder %s28, 0
      %p112 = por %p110, %p111
      %p113 = scmp.ne.s32.totalorder %s101, %s102
      %p114 = scmp.eq.s32.totalorder %s29, 1
      %p115 = por %p113, %p114
      %p117 = scmp.ne.s32.totalorder %s102, %s116
      %p118 = scmp.eq.s32.totalorder %s29, 0
      %p119 = por %p117, %p118
      %s121 = sadd.s32 %s120, 1
      %p124 = scmp.eq.s32.totalorder %s23, 1
      %p125 = scmp.ne.s32.totalorder %s120, %s122
      %p126 = scmp.eq.s32.totalorder %s23, 0
      %p127 = por %p125, %p126
      %p128 = scmp.ne.s32.totalorder %s120, %s122
      %p129 = scmp.eq.s32.totalorder %s28, 1
      %p130 = por %p128, %p129
      %p131 = scmp.ne.s32.totalorder %s122, %s123
      %p132 = scmp.eq.s32.totalorder %s28, 0
      %p133 = por %p131, %p132
      %p134 = scmp.ne.s32.totalorder %s122, %s123
      %p135 = scmp.eq.s32.totalorder %s29, 1
      %p136 = por %p134, %p135
      %p138 = scmp.ne.s32.totalorder %s123, %s137
      %p139 = scmp.eq.s32.totalorder %s29, 0
      %p140 = por %p138, %p139
      %s142 = sadd.s32 %s141, 1
      %p145 = scmp.eq.s32.totalorder %s23, 1
      %p146 = scmp.ne.s32.totalorder %s141, %s143
      %p147 = scmp.eq.s32.totalorder %s23, 0
      %p148 = por %p146, %p147
      %p149 = scmp.ne.s32.totalorder %s141, %s143
      %p150 = scmp.eq.s32.totalorder %s28, 1
      %p151 = por %p149, %p150
      %p152 = scmp.ne.s32.totalorder %s143, %s144
      %p153 = scmp.eq.s32.totalorder %s28, 0
      %p154 = por %p152, %p153
      %p155 = scmp.ne.s32.totalorder %s143, %s144
      %p156 = scmp.eq.s32.totalorder %s29, 1
      %p157 = por %p155, %p156
      %p159 = scmp.ne.s32.totalorder %s144, %s158
      %p160 = scmp.eq.s32.totalorder %s29, 0
      %p161 = por %p159, %p160
      %s163 = sadd.s32 %s162, 1
      %p166 = scmp.eq.s32.totalorder %s23, 1
      %p167 = scmp.ne.s32.totalorder %s162, %s164
      %p168 = scmp.eq.s32.totalorder %s23, 0
      %p169 = por %p167, %p168
      %p170 = scmp.ne.s32.totalorder %s162, %s164
      %p171 = scmp.eq.s32.totalorder %s28, 1
      %p172 = por %p170, %p171
      %p173 = scmp.ne.s32.totalorder %s164, %s165
      %p174 = scmp.eq.s32.totalorder %s28, 0
      %p175 = por %p173, %p174
      %p176 = scmp.ne.s32.totalorder %s164, %s165
      %p177 = scmp.eq.s32.totalorder %s29, 1
      %p178 = por %p176, %p177
      %p180 = scmp.ne.s32.totalorder %s165, %s179
      %p181 = scmp.eq.s32.totalorder %s29, 0
      %p182 = por %p180, %p181
      %s184 = sadd.s32 %s183, 1
      %p187 = scmp.eq.s32.totalorder %s23, 1
      %p188 = scmp.ne.s32.totalorder %s183, %s185
      %p189 = scmp.eq.s32.totalorder %s23, 0
      %p190 = por %p188, %p189
      %p191 = scmp.ne.s32.totalorder %s183, %s185
      %p192 = scmp.eq.s32.totalorder %s28, 1
      %p193 = por %p191, %p192
      %p194 = scmp.ne.s32.totalorder %s185, %s186
      %p195 = scmp.eq.s32.totalorder %s28, 0
      %p196 = por %p194, %p195
      %p197 = scmp.ne.s32.totalorder %s185, %s186
      %p198 = scmp.eq.s32.totalorder %s29, 1
      %p199 = por %p197, %p198
      %p201 = scmp.ne.s32.totalorder %s186, %s200
      %p202 = scmp.eq.s32.totalorder %s29, 0
      %p203 = por %p201, %p202
      %s204 = ssub.s32 %s23, %s30
      %p205 = scmp.eq.s32.totalorder %s204, 0
      %s207 = sadd.s32 %s206, 1
      %s208 = scalar_select %p205, %s206, %s207
      %p211 = pneg %p205
      %p212 = scmp.eq.s32.totalorder %s23, 1
      %p213 = por %p211, %p212
      %p214 = scmp.ne.s32.totalorder %s206, %s209
      %p215 = scmp.eq.s32.totalorder %s23, 0
      %p216 = por %p214, %p215
      %p217 = scmp.ne.s32.totalorder %s206, %s209
      %p218 = scmp.eq.s32.totalorder %s28, 1
      %p219 = por %p217, %p218
      %p220 = scmp.ne.s32.totalorder %s209, %s210
      %p221 = scmp.eq.s32.totalorder %s28, 0
      %p222 = por %p220, %p221
      %p223 = scmp.ne.s32.totalorder %s209, %s210
      %p224 = scmp.eq.s32.totalorder %s29, 1
      %p225 = por %p223, %p224
      %p227 = scmp.ne.s32.totalorder %s210, %s226
      %p228 = scmp.eq.s32.totalorder %s29, 0
      %p229 = por %p227, %p228
      %p230 = scmp.le.s32.totalorder 1, %s23
      %p231 = scmp.lt.s32.totalorder %s23, 3
      %p232 = pnand %p230, %p231
      %p233 = pneg %p232
      // Predicated region
      $region9: #{tpu_custom_call.1} parent=5 // pred_check
        _
      $region10: #{tpu_custom_call.1} parent=5 // pred_check_branch
        %235 = sbr.rel (%p232) target = $region12
      $region11: #{tpu_custom_call.1} parent=5 // pred_region
        %s236 = ssub.s32 %s23, 1
        // Predicated region
        $region13: #{tpu_custom_call.1} parent=11 // pred_check
          %p237 = pneg %p44
        $region14: #{tpu_custom_call.1} parent=11 // pred_check_branch
          %239 = sbr.rel (%p237) target = $region16
        $region15: #{tpu_custom_call.1} parent=11 // pred_region
          _
        $region16: #{tpu_custom_call.1} parent=11 // pred_fallthru
          _
        // Predicated region
        $region17: #{tpu_custom_call.1} parent=11 // pred_check
          %p240 = pneg %p91
        $region18: #{tpu_custom_call.1} parent=11 // pred_check_branch
          %242 = sbr.rel (%p240) target = $region20
        $region19: #{tpu_custom_call.1} parent=11 // pred_region
          %244 = vsyncadd [#allocation7], 0
          %s245 = sshll.u32 %s2, 4
          %s246 = int_to_ptr.hbm [resolvable:$true] %s245
          %s247 = sshll.u32 [#allocation6], 4
          %s248 = int_to_ptr.vmem [resolvable:$true] %s247
          %253 = dma.hbm_to_vmem [thread:$0]  %s246, 2048, %s248, [#allocation7], 128, 128, 8
        $region20: #{tpu_custom_call.1} parent=11 // pred_fallthru
          _
        // Predicated region
        $region21: #{tpu_custom_call.1} parent=11 // pred_check
          %p254 = pneg %p112
        $region22: #{tpu_custom_call.1} parent=11 // pred_check_branch
          %256 = sbr.rel (%p254) target = $region24
        $region23: #{tpu_custom_call.1} parent=11 // pred_region
          _
        $region24: #{tpu_custom_call.1} parent=11 // pred_fallthru
          _
        // Predicated region
        $region25: #{tpu_custom_call.1} parent=11 // pred_check
          %p257 = pneg %p133
        $region26: #{tpu_custom_call.1} parent=11 // pred_check_branch
          %259 = sbr.rel (%p257) target = $region28
        $region27: #{tpu_custom_call.1} parent=11 // pred_region
          %261 = vsyncadd [#allocation7], 0
          %s262 = sshll.u32 %s4, 4
          %s263 = int_to_ptr.hbm [resolvable:$true] %s262
          %s264 = sshll.u32 [#allocation8], 4
          %s265 = int_to_ptr.vmem [resolvable:$true] %s264
          %270 = dma.hbm_to_vmem [thread:$0]  %s263, 4096, %s265, [#allocation7], 128, 128, 8
        $region28: #{tpu_custom_call.1} parent=11 // pred_fallthru
          _
        // Predicated region
        $region29: #{tpu_custom_call.1} parent=11 // pred_check
          %p271 = pneg %p154
        $region30: #{tpu_custom_call.1} parent=11 // pred_check_branch
          %273 = sbr.rel (%p271) target = $region32
        $region31: #{tpu_custom_call.1} parent=11 // pred_region
          _
        $region32: #{tpu_custom_call.1} parent=11 // pred_fallthru
          _
        // Predicated region
        $region33: #{tpu_custom_call.1} parent=11 // pred_check
          %p274 = pneg %p175
        $region34: #{tpu_custom_call.1} parent=11 // pred_check_branch
          %276 = sbr.rel (%p274) target = $region36
        $region35: #{tpu_custom_call.1} parent=11 // pred_region
          %278 = vsyncadd [#allocation10], 0
          %s279 = sshll.u32 %s6, 4
          %s280 = int_to_ptr.hbm [resolvable:$true] %s279
          %s281 = sshll.u32 [#allocation9], 4
          %s282 = int_to_ptr.vmem [resolvable:$true] %s281
          %287 = dma.hbm_to_vmem [thread:$0]  %s280, 2048, %s282, [#allocation10], 64, 64, 4
        $region36: #{tpu_custom_call.1} parent=11 // pred_fallthru
          _
        // Predicated region
        $region37: #{tpu_custom_call.1} parent=11 // pred_check
          %p288 = pneg %p196
        $region38: #{tpu_custom_call.1} parent=11 // pred_check_branch
          %290 = sbr.rel (%p288) target = $region40
        $region39: #{tpu_custom_call.1} parent=11 // pred_region
          _
        $region40: #{tpu_custom_call.1} parent=11 // pred_fallthru
          _
      $region12: #{tpu_custom_call.1} parent=5 // pred_fallthru
        _
      %p291 = scmp.lt.s32.totalorder %s23, 2
      // Predicated region
      $region41: #{tpu_custom_call.1} parent=5 // pred_check
        %p292 = pneg %p291
      $region42: #{tpu_custom_call.1} parent=5 // pred_check_branch
        %294 = sbr.rel (%p292) target = $region44
      $region43: #{tpu_custom_call.1} parent=5 // pred_region
        // Predicated region
        $region45: #{tpu_custom_call.1} parent=43 // pred_check
          %p295 = pneg %p64
        $region46: #{tpu_custom_call.1} parent=43 // pred_check_branch
          %297 = sbr.rel (%p295) target = $region48
        $region47: #{tpu_custom_call.1} parent=43 // pred_region
          %s298 = sand.u32 %s54, 1
          %s299 = scalar_lea.sflag [#allocation4], %s298
          %s300 = sand.u32 %s54, 1
          %s301 = smul.addr %s300, 16
          %s302 = scalar_lea.vmem [#allocation3], %s301
          %s303 = smul.u32 4, %s23
          %305 = vsyncadd %s299, 0
          %s306 = smul.addr %s303, 4
          %s307 = scalar_lea.hbm %s1, %s306
          %s308 = sshll.u32 %s307, 4
          %s309 = int_to_ptr.hbm [resolvable:$true] %s308
          %s310 = sshll.u32 %s302, 4
          %s311 = int_to_ptr.vmem [resolvable:$true] %s310
          %316 = dma.hbm_to_vmem [thread:$0]  %s309, 256, %s311, %s299, 64, 64, 4
        $region48: #{tpu_custom_call.1} parent=43 // pred_fallthru
          _
      $region44: #{tpu_custom_call.1} parent=5 // pred_fallthru
        _
      %p317 = scmp.le.s32.totalorder 1, %s23
      %p318 = scmp.lt.s32.totalorder %s23, 3
      %p319 = pnand %p317, %p318
      %p320 = pneg %p319
      // Predicated region
      $region49: #{tpu_custom_call.1} parent=5 // pred_check
        _
      $region50: #{tpu_custom_call.1} parent=5 // pred_check_branch
        %322 = sbr.rel (%p319) target = $region52
      $region51: #{tpu_custom_call.1} parent=5 // pred_region
        %s323 = ssub.s32 %s23, 1
        %s324 = sand.u32 %s57, 1
        %s325 = scalar_lea.sflag [#allocation4], %s324
        %s326 = sand.u32 %s57, 1
        %s327 = smul.addr %s326, 16
        %s328 = scalar_lea.vmem [#allocation3], %s327
        // Predicated region
        $region53: #{tpu_custom_call.1} parent=51 // pred_check
          %p329 = pneg %p70
        $region54: #{tpu_custom_call.1} parent=51 // pred_check_branch
          %331 = sbr.rel (%p329) target = $region56
        $region55: #{tpu_custom_call.1} parent=51 // pred_region
          %333 = dma.done %s325, 256
        $region56: #{tpu_custom_call.1} parent=51 // pred_fallthru
          _
        // Predicated region
        $region57: #{tpu_custom_call.1} parent=51 // pred_check
          %p334 = pneg %p91
        $region58: #{tpu_custom_call.1} parent=51 // pred_check_branch
          %336 = sbr.rel (%p334) target = $region60
        $region59: #{tpu_custom_call.1} parent=51 // pred_region
          %338 = dma.done [#allocation7], 2048
        $region60: #{tpu_custom_call.1} parent=51 // pred_fallthru
          _
        // Predicated region
        $region61: #{tpu_custom_call.1} parent=51 // pred_check
          %p339 = pneg %p133
        $region62: #{tpu_custom_call.1} parent=51 // pred_check_branch
          %341 = sbr.rel (%p339) target = $region64
        $region63: #{tpu_custom_call.1} parent=51 // pred_region
          %343 = dma.done [#allocation7], 4096
        $region64: #{tpu_custom_call.1} parent=51 // pred_fallthru
          _
        // Predicated region
        $region65: #{tpu_custom_call.1} parent=51 // pred_check
          %p344 = pneg %p175
        $region66: #{tpu_custom_call.1} parent=51 // pred_check_branch
          %346 = sbr.rel (%p344) target = $region68
        $region67: #{tpu_custom_call.1} parent=51 // pred_region
          %348 = dma.done [#allocation10], 2048
        $region68: #{tpu_custom_call.1} parent=51 // pred_fallthru
          _
        %p349 = pneg %p44
        %p350 = pneg %p41
        %s351 = sand.u32 %s57, 1
        %s352 = scalar_lea.sflag [#allocation4], %s351
        %s353 = sand.u32 %s57, 1
        %s354 = smul.addr %s353, 16
        %s355 = scalar_lea.vmem [#allocation3], %s354
        %p356 = pneg %p70
        %p357 = pneg %p67
        %p358 = pneg %p91
        %p359 = pneg %p88
        %p360 = pneg %p112
        %p361 = pneg %p109
        %p362 = pneg %p133
        %p363 = pneg %p130
        %p364 = pneg %p154
        %p365 = pneg %p151
        %p366 = pneg %p175
        %p367 = pneg %p172
        %p368 = pneg %p196
        %p369 = pneg %p193
        %p370 = pneg %p222
        %p371 = pneg %p219
        %s372 = sand.u32 %s209, 1
        %s373 = scalar_lea.sflag [#allocation5], %s372
        %s374 = sand.u32 %s209, 1
        %s375 = smul.addr %s374, 16
        %s376 = scalar_lea.vmem [#allocation11], %s375
        %s377 = smul.u32 4, %s28
        %s378 = smul.u32 4, %s28
        %s379 = sld [smem:[#allocation2]]
        %v380 = vld [vmem:[%s328] sm:$0xf]
        %v381 = vld [vmem:[%s328 + $0x4] sm:$0xf]
        %v382 = vld [vmem:[%s328 + $0x8] sm:$0xf]
        %v383 = vld [vmem:[%s328 + $0xc] sm:$0xf]
        %v384 = vld [vmem:[#allocation6] sm:$0xff]
        %v385 = vld [vmem:[#allocation6 + $0x8] sm:$0xff]
        %v386 = vld [vmem:[#allocation6 + $0x10] sm:$0xff]
        %v387 = vld [vmem:[#allocation6 + $0x18] sm:$0xff]
        %v388 = vld [vmem:[#allocation6 + $0x20] sm:$0xff]
        %v389 = vld [vmem:[#allocation6 + $0x28] sm:$0xff]
        %v390 = vld [vmem:[#allocation6 + $0x30] sm:$0xff]
        %v391 = vld [vmem:[#allocation6 + $0x38] sm:$0xff]
        %v392 = vld [vmem:[#allocation6 + $0x40] sm:$0xff]
        %v393 = vld [vmem:[#allocation6 + $0x48] sm:$0xff]
        %v394 = vld [vmem:[#allocation6 + $0x50] sm:$0xff]
        %v395 = vld [vmem:[#allocation6 + $0x58] sm:$0xff]
        %v396 = vld [vmem:[#allocation6 + $0x60] sm:$0xff]
        %v397 = vld [vmem:[#allocation6 + $0x68] sm:$0xff]
        %v398 = vld [vmem:[#allocation6 + $0x70] sm:$0xff]
        %v399 = vld [vmem:[#allocation6 + $0x78] sm:$0xff]
        %v400 = vld [vmem:[%s3] sm:$0x3]
        %v402 = vperm.slane %v400, 0
        %v403 = vperm.slane %v400, 1
        %v410 = vunpack.c.l.b16 %v380
        %v411 = vunpack.c.l.b16 %v381
        %v412 = vunpack.c.l.b16 %v382
        %v413 = vunpack.c.l.b16 %v383
        %v414 = vpack.c.b16 %v411, %v410
        %v415 = vpack.c.b16 %v413, %v412
        %v434 = vunpack.c.l.b16 %v384
        %v435 = vunpack.c.h.b16 %v384
        %v436 = vunpack.c.l.b16 %v385
        %v437 = vunpack.c.h.b16 %v385
        %v438 = vunpack.c.l.b16 %v386
        %v439 = vunpack.c.h.b16 %v386
        %v440 = vunpack.c.l.b16 %v387
        %v441 = vunpack.c.h.b16 %v387
        %v442 = vunpack.c.l.b16 %v388
        %v443 = vunpack.c.h.b16 %v388
        %v444 = vunpack.c.l.b16 %v389
        %v445 = vunpack.c.h.b16 %v389
        %v446 = vunpack.c.l.b16 %v390
        %v447 = vunpack.c.h.b16 %v390
        %v448 = vunpack.c.l.b16 %v391
        %v449 = vunpack.c.h.b16 %v391
        %v450 = vunpack.c.l.b16 %v392
        %v451 = vunpack.c.h.b16 %v392
        %v452 = vunpack.c.l.b16 %v393
        %v453 = vunpack.c.h.b16 %v393
        %v454 = vunpack.c.l.b16 %v394
        %v455 = vunpack.c.h.b16 %v394
        %v456 = vunpack.c.l.b16 %v395
        %v457 = vunpack.c.h.b16 %v395
        %v458 = vunpack.c.l.b16 %v396
        %v459 = vunpack.c.h.b16 %v396
        %v460 = vunpack.c.l.b16 %v397
        %v461 = vunpack.c.h.b16 %v397
        %v462 = vunpack.c.l.b16 %v398
        %v463 = vunpack.c.h.b16 %v398
        %v464 = vunpack.c.l.b16 %v399
        %v465 = vunpack.c.h.b16 %v399
        %v466 = vpack.c.b16 %v436, %v434
        %v467 = vpack.c.b16 %v437, %v435
        %v468 = vpack.c.b16 %v440, %v438
        %v469 = vpack.c.b16 %v441, %v439
        %v470 = vpack.c.b16 %v444, %v442
        %v471 = vpack.c.b16 %v445, %v443
        %v472 = vpack.c.b16 %v448, %v446
        %v473 = vpack.c.b16 %v449, %v447
        %v474 = vpack.c.b16 %v452, %v450
        %v475 = vpack.c.b16 %v453, %v451
        %v476 = vpack.c.b16 %v456, %v454
        %v477 = vpack.c.b16 %v457, %v455
        %v478 = vpack.c.b16 %v460, %v458
        %v479 = vpack.c.b16 %v461, %v459
        %v480 = vpack.c.b16 %v464, %v462
        %v481 = vpack.c.b16 %v465, %v463
        %498 = vmatpush.bf16.msra.mxu0 %v480
        %499 = vmatpush.bf16.msra.mxu0 %v478
        %500 = vmatpush.bf16.msra.mxu0 %v476
        %501 = vmatpush.bf16.msra.mxu0 %v474
        %502 = vmatpush.bf16.msra.mxu0 %v472
        %503 = vmatpush.bf16.msra.mxu0 %v470
        %504 = vmatpush.bf16.msra.mxu0 %v468
        %505 = vmatpush.bf16.msra.mxu0 %v466
        %506 = vmatmul.bf16.gmra.mxu0 %v414
        %v507 = vpop.f32.mrf.mxu0
        %v508 = vadd.f32 %v402, %v507
        %v509 = vpop.f32.mrf.mxu0
        %v510 = vadd.f32 %v402, %v509
        %511 = vmatmul.bf16.gmra.mxu0 %v415
        %v512 = vpop.f32.mrf.mxu0
        %v513 = vadd.f32 %v402, %v512
        %v514 = vpop.f32.mrf.mxu0
        %v515 = vadd.f32 %v402, %v514
        %516 = vdwg.mxu0
        %517 = vmatpush.bf16.msra.mxu0 %v481
        %518 = vmatpush.bf16.msra.mxu0 %v479
        %519 = vmatpush.bf16.msra.mxu0 %v477
        %520 = vmatpush.bf16.msra.mxu0 %v475
        %521 = vmatpush.bf16.msra.mxu0 %v473
        %522 = vmatpush.bf16.msra.mxu0 %v471
        %523 = vmatpush.bf16.msra.mxu0 %v469
        %524 = vmatpush.bf16.msra.mxu0 %v467
        %525 = vmatmul.bf16.gmra.mxu0 %v414
        %v526 = vpop.f32.mrf.mxu0
        %v527 = vadd.f32 %v403, %v526
        %v528 = vpop.f32.mrf.mxu0
        %v529 = vadd.f32 %v403, %v528
        %530 = vmatmul.bf16.gmra.mxu0 %v415
        %v531 = vpop.f32.mrf.mxu0
        %v532 = vadd.f32 %v403, %v531
        %v533 = vpop.f32.mrf.mxu0
        %v534 = vadd.f32 %v403, %v533
        %535 = vdwg.mxu0
        %v536 = vmax.f32 %v508, 0.0
        %v537 = vmax.f32 %v527, 0.0
        %v538 = vmax.f32 %v510, 0.0
        %v539 = vmax.f32 %v529, 0.0
        %v540 = vmax.f32 %v513, 0.0
        %v541 = vmax.f32 %v532, 0.0
        %v542 = vmax.f32 %v515, 0.0
        %v543 = vmax.f32 %v534, 0.0
        %v544 = vstv %s379
        %v545 = vmul.f32 %v536, %v544
        %v546 = vmul.f32 %v537, %v544
        %v547 = vmul.f32 %v538, %v544
        %v548 = vmul.f32 %v539, %v544
        %v549 = vmul.f32 %v540, %v544
        %v550 = vmul.f32 %v541, %v544
        %v551 = vmul.f32 %v542, %v544
        %v552 = vmul.f32 %v543, %v544
        %v553 = vpack.c.bf16 %v547, %v545
        %v554 = vpack.c.bf16 %v548, %v546
        %v555 = vpack.c.bf16 %v551, %v549
        %v556 = vpack.c.bf16 %v552, %v550
        %v557 = vld [vmem:[#allocation8] sm:$0xff]
        %v558 = vld [vmem:[#allocation8 + $0x8] sm:$0xff]
        %v559 = vld [vmem:[#allocation8 + $0x10] sm:$0xff]
        %v560 = vld [vmem:[#allocation8 + $0x18] sm:$0xff]
        %v561 = vld [vmem:[#allocation8 + $0x20] sm:$0xff]
        %v562 = vld [vmem:[#allocation8 + $0x28] sm:$0xff]
        %v563 = vld [vmem:[#allocation8 + $0x30] sm:$0xff]
        %v564 = vld [vmem:[#allocation8 + $0x38] sm:$0xff]
        %v565 = vld [vmem:[#allocation8 + $0x40] sm:$0xff]
        %v566 = vld [vmem:[#allocation8 + $0x48] sm:$0xff]
        %v567 = vld [vmem:[#allocation8 + $0x50] sm:$0xff]
        %v568 = vld [vmem:[#allocation8 + $0x58] sm:$0xff]
        %v569 = vld [vmem:[#allocation8 + $0x60] sm:$0xff]
        %v570 = vld [vmem:[#allocation8 + $0x68] sm:$0xff]
        %v571 = vld [vmem:[#allocation8 + $0x70] sm:$0xff]
        %v572 = vld [vmem:[#allocation8 + $0x78] sm:$0xff]
        %v573 = vld [vmem:[#allocation8 + $0x80] sm:$0xff]
        %v574 = vld [vmem:[#allocation8 + $0x88] sm:$0xff]
        %v575 = vld [vmem:[#allocation8 + $0x90] sm:$0xff]
        %v576 = vld [vmem:[#allocation8 + $0x98] sm:$0xff]
        %v577 = vld [vmem:[#allocation8 + $0xa0] sm:$0xff]
        %v578 = vld [vmem:[#allocation8 + $0xa8] sm:$0xff]
        %v579 = vld [vmem:[#allocation8 + $0xb0] sm:$0xff]
        %v580 = vld [vmem:[#allocation8 + $0xb8] sm:$0xff]
        %v581 = vld [vmem:[#allocation8 + $0xc0] sm:$0xff]
        %v582 = vld [vmem:[#allocation8 + $0xc8] sm:$0xff]
        %v583 = vld [vmem:[#allocation8 + $0xd0] sm:$0xff]
        %v584 = vld [vmem:[#allocation8 + $0xd8] sm:$0xff]
        %v585 = vld [vmem:[#allocation8 + $0xe0] sm:$0xff]
        %v586 = vld [vmem:[#allocation8 + $0xe8] sm:$0xff]
        %v587 = vld [vmem:[#allocation8 + $0xf0] sm:$0xff]
        %v588 = vld [vmem:[#allocation8 + $0xf8] sm:$0xff]
        %v589 = vld [vmem:[%s5] sm:$0x3]
        %v591 = vperm.slane %v589, 0
        %v592 = vperm.slane %v589, 1
        %v627 = vunpack.c.l.b16 %v557
        %v628 = vunpack.c.h.b16 %v557
        %v629 = vunpack.c.l.b16 %v558
        %v630 = vunpack.c.h.b16 %v558
        %v631 = vunpack.c.l.b16 %v559
        %v632 = vunpack.c.h.b16 %v559
        %v633 = vunpack.c.l.b16 %v560
        %v634 = vunpack.c.h.b16 %v560
        %v635 = vunpack.c.l.b16 %v561
        %v636 = vunpack.c.h.b16 %v561
        %v637 = vunpack.c.l.b16 %v562
        %v638 = vunpack.c.h.b16 %v562
        %v639 = vunpack.c.l.b16 %v563
        %v640 = vunpack.c.h.b16 %v563
        %v641 = vunpack.c.l.b16 %v564
        %v642 = vunpack.c.h.b16 %v564
        %v643 = vunpack.c.l.b16 %v565
        %v644 = vunpack.c.h.b16 %v565
        %v645 = vunpack.c.l.b16 %v566
        %v646 = vunpack.c.h.b16 %v566
        %v647 = vunpack.c.l.b16 %v567
        %v648 = vunpack.c.h.b16 %v567
        %v649 = vunpack.c.l.b16 %v568
        %v650 = vunpack.c.h.b16 %v568
        %v651 = vunpack.c.l.b16 %v569
        %v652 = vunpack.c.h.b16 %v569
        %v653 = vunpack.c.l.b16 %v570
        %v654 = vunpack.c.h.b16 %v570
        %v655 = vunpack.c.l.b16 %v571
        %v656 = vunpack.c.h.b16 %v571
        %v657 = vunpack.c.l.b16 %v572
        %v658 = vunpack.c.h.b16 %v572
        %v659 = vunpack.c.l.b16 %v573
        %v660 = vunpack.c.h.b16 %v573
        %v661 = vunpack.c.l.b16 %v574
        %v662 = vunpack.c.h.b16 %v574
        %v663 = vunpack.c.l.b16 %v575
        %v664 = vunpack.c.h.b16 %v575
        %v665 = vunpack.c.l.b16 %v576
        %v666 = vunpack.c.h.b16 %v576
        %v667 = vunpack.c.l.b16 %v577
        %v668 = vunpack.c.h.b16 %v577
        %v669 = vunpack.c.l.b16 %v578
        %v670 = vunpack.c.h.b16 %v578
        %v671 = vunpack.c.l.b16 %v579
        %v672 = vunpack.c.h.b16 %v579
        %v673 = vunpack.c.l.b16 %v580
        %v674 = vunpack.c.h.b16 %v580
        %v675 = vunpack.c.l.b16 %v581
        %v676 = vunpack.c.h.b16 %v581
        %v677 = vunpack.c.l.b16 %v582
        %v678 = vunpack.c.h.b16 %v582
        %v679 = vunpack.c.l.b16 %v583
        %v680 = vunpack.c.h.b16 %v583
        %v681 = vunpack.c.l.b16 %v584
        %v682 = vunpack.c.h.b16 %v584
        %v683 = vunpack.c.l.b16 %v585
        %v684 = vunpack.c.h.b16 %v585
        %v685 = vunpack.c.l.b16 %v586
        %v686 = vunpack.c.h.b16 %v586
        %v687 = vunpack.c.l.b16 %v587
        %v688 = vunpack.c.h.b16 %v587
        %v689 = vunpack.c.l.b16 %v588
        %v690 = vunpack.c.h.b16 %v588
        %v691 = vpack.c.b16 %v629, %v627
        %v692 = vpack.c.b16 %v630, %v628
        %v693 = vpack.c.b16 %v633, %v631
        %v694 = vpack.c.b16 %v634, %v632
        %v695 = vpack.c.b16 %v637, %v635
        %v696 = vpack.c.b16 %v638, %v636
        %v697 = vpack.c.b16 %v641, %v639
        %v698 = vpack.c.b16 %v642, %v640
        %v699 = vpack.c.b16 %v645, %v643
        %v700 = vpack.c.b16 %v646, %v644
        %v701 = vpack.c.b16 %v649, %v647
        %v702 = vpack.c.b16 %v650, %v648
        %v703 = vpack.c.b16 %v653, %v651
        %v704 = vpack.c.b16 %v654, %v652
        %v705 = vpack.c.b16 %v657, %v655
        %v706 = vpack.c.b16 %v658, %v656
        %v707 = vpack.c.b16 %v661, %v659
        %v708 = vpack.c.b16 %v662, %v660
        %v709 = vpack.c.b16 %v665, %v663
        %v710 = vpack.c.b16 %v666, %v664
        %v711 = vpack.c.b16 %v669, %v667
        %v712 = vpack.c.b16 %v670, %v668
        %v713 = vpack.c.b16 %v673, %v671
        %v714 = vpack.c.b16 %v674, %v672
        %v715 = vpack.c.b16 %v677, %v675
        %v716 = vpack.c.b16 %v678, %v676
        %v717 = vpack.c.b16 %v681, %v679
        %v718 = vpack.c.b16 %v682, %v680
        %v719 = vpack.c.b16 %v685, %v683
        %v720 = vpack.c.b16 %v686, %v684
        %v721 = vpack.c.b16 %v689, %v687
        %v722 = vpack.c.b16 %v690, %v688
        %755 = vmatpush.bf16.msra.mxu0 %v705
        %756 = vmatpush.bf16.msra.mxu0 %v703
        %757 = vmatpush.bf16.msra.mxu0 %v701
        %758 = vmatpush.bf16.msra.mxu0 %v699
        %759 = vmatpush.bf16.msra.mxu0 %v697
        %760 = vmatpush.bf16.msra.mxu0 %v695
        %761 = vmatpush.bf16.msra.mxu0 %v693
        %762 = vmatpush.bf16.msra.mxu0 %v691
        %763 = vmatmul.bf16.gmra.mxu0 %v553
        %v764 = vpop.f32.mrf.mxu0
        %v765 = vadd.f32 %v591, %v764
        %v766 = vpop.f32.mrf.mxu0
        %v767 = vadd.f32 %v591, %v766
        %768 = vmatmul.bf16.gmra.mxu0 %v555
        %v769 = vpop.f32.mrf.mxu0
        %v770 = vadd.f32 %v591, %v769
        %v771 = vpop.f32.mrf.mxu0
        %v772 = vadd.f32 %v591, %v771
        %773 = vdwg.mxu0
        %774 = vmatpush.bf16.msra.mxu0 %v721
        %775 = vmatpush.bf16.msra.mxu0 %v719
        %776 = vmatpush.bf16.msra.mxu0 %v717
        %777 = vmatpush.bf16.msra.mxu0 %v715
        %778 = vmatpush.bf16.msra.mxu0 %v713
        %779 = vmatpush.bf16.msra.mxu0 %v711
        %780 = vmatpush.bf16.msra.mxu0 %v709
        %781 = vmatpush.bf16.msra.mxu0 %v707
        %782 = vmatmul.bf16.gmra.mxu0 %v554
        %v783 = vpop.f32.mrf.mxu0
        %v784 = vadd.f32 %v765, %v783
        %v785 = vpop.f32.mrf.mxu0
        %v786 = vadd.f32 %v767, %v785
        %787 = vmatmul.bf16.gmra.mxu0 %v556
        %v788 = vpop.f32.mrf.mxu0
        %v789 = vadd.f32 %v770, %v788
        %v790 = vpop.f32.mrf.mxu0
        %v791 = vadd.f32 %v772, %v790
        %792 = vdwg.mxu0
        %793 = vmatpush.bf16.msra.mxu0 %v706
        %794 = vmatpush.bf16.msra.mxu0 %v704
        %795 = vmatpush.bf16.msra.mxu0 %v702
        %796 = vmatpush.bf16.msra.mxu0 %v700
        %797 = vmatpush.bf16.msra.mxu0 %v698
        %798 = vmatpush.bf16.msra.mxu0 %v696
        %799 = vmatpush.bf16.msra.mxu0 %v694
        %800 = vmatpush.bf16.msra.mxu0 %v692
        %801 = vmatmul.bf16.gmra.mxu0 %v553
        %v802 = vpop.f32.mrf.mxu0
        %v803 = vadd.f32 %v592, %v802
        %v804 = vpop.f32.mrf.mxu0
        %v805 = vadd.f32 %v592, %v804
        %806 = vmatmul.bf16.gmra.mxu0 %v555
        %v807 = vpop.f32.mrf.mxu0
        %v808 = vadd.f32 %v592, %v807
        %v809 = vpop.f32.mrf.mxu0
        %v810 = vadd.f32 %v592, %v809
        %811 = vdwg.mxu0
        %812 = vmatpush.bf16.msra.mxu0 %v722
        %813 = vmatpush.bf16.msra.mxu0 %v720
        %814 = vmatpush.bf16.msra.mxu0 %v718
        %815 = vmatpush.bf16.msra.mxu0 %v716
        %816 = vmatpush.bf16.msra.mxu0 %v714
        %817 = vmatpush.bf16.msra.mxu0 %v712
        %818 = vmatpush.bf16.msra.mxu0 %v710
        %819 = vmatpush.bf16.msra.mxu0 %v708
        %820 = vmatmul.bf16.gmra.mxu0 %v554
        %v821 = vpop.f32.mrf.mxu0
        %v822 = vadd.f32 %v803, %v821
        %v823 = vpop.f32.mrf.mxu0
        %v824 = vadd.f32 %v805, %v823
        %825 = vmatmul.bf16.gmra.mxu0 %v556
        %v826 = vpop.f32.mrf.mxu0
        %v827 = vadd.f32 %v808, %v826
        %v828 = vpop.f32.mrf.mxu0
        %v829 = vadd.f32 %v810, %v828
        %830 = vdwg.mxu0
        %v831 = vmul.f32 %v784, %v544
        %v832 = vmul.f32 %v822, %v544
        %v833 = vmul.f32 %v786, %v544
        %v834 = vmul.f32 %v824, %v544
        %v835 = vmul.f32 %v789, %v544
        %v836 = vmul.f32 %v827, %v544
        %v837 = vmul.f32 %v791, %v544
        %v838 = vmul.f32 %v829, %v544
        %v839 = vpack.c.bf16 %v833, %v831
        %v840 = vpack.c.bf16 %v834, %v832
        %v841 = vpack.c.bf16 %v837, %v835
        %v842 = vpack.c.bf16 %v838, %v836
        %v843 = vld [vmem:[#allocation9] sm:$0xf]
        %v844 = vld [vmem:[#allocation9 + $0x4] sm:$0xf]
        %v845 = vld [vmem:[#allocation9 + $0x8] sm:$0xf]
        %v846 = vld [vmem:[#allocation9 + $0xc] sm:$0xf]
        %v847 = vld [vmem:[#allocation9 + $0x10] sm:$0xf]
        %v848 = vld [vmem:[#allocation9 + $0x14] sm:$0xf]
        %v849 = vld [vmem:[#allocation9 + $0x18] sm:$0xf]
        %v850 = vld [vmem:[#allocation9 + $0x1c] sm:$0xf]
        %v851 = vld [vmem:[#allocation9 + $0x20] sm:$0xf]
        %v852 = vld [vmem:[#allocation9 + $0x24] sm:$0xf]
        %v853 = vld [vmem:[#allocation9 + $0x28] sm:$0xf]
        %v854 = vld [vmem:[#allocation9 + $0x2c] sm:$0xf]
        %v855 = vld [vmem:[#allocation9 + $0x30] sm:$0xf]
        %v856 = vld [vmem:[#allocation9 + $0x34] sm:$0xf]
        %v857 = vld [vmem:[#allocation9 + $0x38] sm:$0xf]
        %v858 = vld [vmem:[#allocation9 + $0x3c] sm:$0xf]
        %v859 = vld [vmem:[#allocation9 + $0x40] sm:$0xf]
        %v860 = vld [vmem:[#allocation9 + $0x44] sm:$0xf]
        %v861 = vld [vmem:[#allocation9 + $0x48] sm:$0xf]
        %v862 = vld [vmem:[#allocation9 + $0x4c] sm:$0xf]
        %v863 = vld [vmem:[#allocation9 + $0x50] sm:$0xf]
        %v864 = vld [vmem:[#allocation9 + $0x54] sm:$0xf]
        %v865 = vld [vmem:[#allocation9 + $0x58] sm:$0xf]
        %v866 = vld [vmem:[#allocation9 + $0x5c] sm:$0xf]
        %v867 = vld [vmem:[#allocation9 + $0x60] sm:$0xf]
        %v868 = vld [vmem:[#allocation9 + $0x64] sm:$0xf]
        %v869 = vld [vmem:[#allocation9 + $0x68] sm:$0xf]
        %v870 = vld [vmem:[#allocation9 + $0x6c] sm:$0xf]
        %v871 = vld [vmem:[#allocation9 + $0x70] sm:$0xf]
        %v872 = vld [vmem:[#allocation9 + $0x74] sm:$0xf]
        %v873 = vld [vmem:[#allocation9 + $0x78] sm:$0xf]
        %v874 = vld [vmem:[#allocation9 + $0x7c] sm:$0xf]
        %v875 = vld [vmem:[%s7] sm:$0x1]
        %v877 = vperm.slane %v875, 0
        %v911 = vunpack.c.l.b16 %v843
        %v912 = vunpack.c.l.b16 %v844
        %v913 = vunpack.c.l.b16 %v845
        %v914 = vunpack.c.l.b16 %v846
        %v915 = vunpack.c.l.b16 %v847
        %v916 = vunpack.c.l.b16 %v848
        %v917 = vunpack.c.l.b16 %v849
        %v918 = vunpack.c.l.b16 %v850
        %v919 = vunpack.c.l.b16 %v851
        %v920 = vunpack.c.l.b16 %v852
        %v921 = vunpack.c.l.b16 %v853
        %v922 = vunpack.c.l.b16 %v854
        %v923 = vunpack.c.l.b16 %v855
        %v924 = vunpack.c.l.b16 %v856
        %v925 = vunpack.c.l.b16 %v857
        %v926 = vunpack.c.l.b16 %v858
        %v927 = vunpack.c.l.b16 %v859
        %v928 = vunpack.c.l.b16 %v860
        %v929 = vunpack.c.l.b16 %v861
        %v930 = vunpack.c.l.b16 %v862
        %v931 = vunpack.c.l.b16 %v863
        %v932 = vunpack.c.l.b16 %v864
        %v933 = vunpack.c.l.b16 %v865
        %v934 = vunpack.c.l.b16 %v866
        %v935 = vunpack.c.l.b16 %v867
        %v936 = vunpack.c.l.b16 %v868
        %v937 = vunpack.c.l.b16 %v869
        %v938 = vunpack.c.l.b16 %v870
        %v939 = vunpack.c.l.b16 %v871
        %v940 = vunpack.c.l.b16 %v872
        %v941 = vunpack.c.l.b16 %v873
        %v942 = vunpack.c.l.b16 %v874
        %v943 = vpack.c.b16 %v912, %v911
        %v944 = vpack.c.b16 %v914, %v913
        %v945 = vpack.c.b16 %v916, %v915
        %v946 = vpack.c.b16 %v918, %v917
        %v947 = vpack.c.b16 %v920, %v919
        %v948 = vpack.c.b16 %v922, %v921
        %v949 = vpack.c.b16 %v924, %v923
        %v950 = vpack.c.b16 %v926, %v925
        %v951 = vpack.c.b16 %v928, %v927
        %v952 = vpack.c.b16 %v930, %v929
        %v953 = vpack.c.b16 %v932, %v931
        %v954 = vpack.c.b16 %v934, %v933
        %v955 = vpack.c.b16 %v936, %v935
        %v956 = vpack.c.b16 %v938, %v937
        %v957 = vpack.c.b16 %v940, %v939
        %v958 = vpack.c.b16 %v942, %v941
        %975 = vmatpush.bf16.msra.mxu0 %v950
        %976 = vmatpush.bf16.msra.mxu0 %v949
        %977 = vmatpush.bf16.msra.mxu0 %v948
        %978 = vmatpush.bf16.msra.mxu0 %v947
        %979 = vmatpush.bf16.msra.mxu0 %v946
        %980 = vmatpush.bf16.msra.mxu0 %v945
        %981 = vmatpush.bf16.msra.mxu0 %v944
        %982 = vmatpush.bf16.msra.mxu0 %v943
        %983 = vmatmul.bf16.gmra.mxu0 %v839
        %v984 = vpop.f32.mrf.mxu0
        %v985 = vadd.f32 %v877, %v984
        %v986 = vpop.f32.mrf.mxu0
        %v987 = vadd.f32 %v877, %v986
        %988 = vmatmul.bf16.gmra.mxu0 %v841
        %v989 = vpop.f32.mrf.mxu0
        %v990 = vadd.f32 %v877, %v989
        %v991 = vpop.f32.mrf.mxu0
        %v992 = vadd.f32 %v877, %v991
        %993 = vdwg.mxu0
        %994 = vmatpush.bf16.msra.mxu0 %v958
        %995 = vmatpush.bf16.msra.mxu0 %v957
        %996 = vmatpush.bf16.msra.mxu0 %v956
        %997 = vmatpush.bf16.msra.mxu0 %v955
        %998 = vmatpush.bf16.msra.mxu0 %v954
        %999 = vmatpush.bf16.msra.mxu0 %v953
        %1000 = vmatpush.bf16.msra.mxu0 %v952
        %1001 = vmatpush.bf16.msra.mxu0 %v951
        %1002 = vmatmul.bf16.gmra.mxu0 %v840
        %v1003 = vpop.f32.mrf.mxu0
        %v1004 = vadd.f32 %v985, %v1003
        %v1005 = vpop.f32.mrf.mxu0
        %v1006 = vadd.f32 %v987, %v1005
        %1007 = vmatmul.bf16.gmra.mxu0 %v842
        %v1008 = vpop.f32.mrf.mxu0
        %v1009 = vadd.f32 %v990, %v1008
        %v1010 = vpop.f32.mrf.mxu0
        %v1011 = vadd.f32 %v992, %v1010
        %1012 = vdwg.mxu0
        %v1013 = vpack.c.bf16 %v1004, %v1004
        %v1014 = vpack.c.bf16 %v1006, %v1006
        %v1015 = vpack.c.bf16 %v1009, %v1009
        %v1016 = vpack.c.bf16 %v1011, %v1011
        %1017 = vst [vmem:[%s376] sm:$0xf] %v1013
        %1018 = vst [vmem:[%s376 + $0x4] sm:$0xf] %v1014
        %1019 = vst [vmem:[%s376 + $0x8] sm:$0xf] %v1015
        %1020 = vst [vmem:[%s376 + $0xc] sm:$0xf] %v1016
        %s1021 = sand.u32 %s209, 1
        %s1022 = scalar_lea.sflag [#allocation5], %s1021
        %s1023 = sand.u32 %s209, 1
        %s1024 = smul.addr %s1023, 16
        %s1025 = scalar_lea.vmem [#allocation11], %s1024
        // Predicated region
        $region69: #{tpu_custom_call.1} parent=51 // pred_check
          %p1026 = pneg %p219
        $region70: #{tpu_custom_call.1} parent=51 // pred_check_branch
          %1028 = sbr.rel (%p1026) target = $region72
        $region71: #{tpu_custom_call.1} parent=51 // pred_region
          %s1029 = smul.u32 4, %s28
          %1031 = vsyncadd %s1022, 0
          %s1032 = smul.addr %s1029, 4
          %s1033 = scalar_lea.hbm %s8, %s1032
          %s1034 = sshll.u32 %s1025, 4
          %s1035 = int_to_ptr.vmem [resolvable:$true] %s1034
          %s1036 = sshll.u32 %s1033, 4
          %s1037 = int_to_ptr.hbm [resolvable:$true] %s1036
          %1042 = dma.vmem_to_hbm [thread:$0]  %s1035, 256, %s1037, %s1022, 64, 64, 4
        $region72: #{tpu_custom_call.1} parent=51 // pred_fallthru
          _
      $region52: #{tpu_custom_call.1} parent=5 // pred_fallthru
        _
      %p1043 = scmp.le.s32.totalorder 2, %s23
      // Predicated region
      $region73: #{tpu_custom_call.1} parent=5 // pred_check
        %p1044 = pneg %p1043
      $region74: #{tpu_custom_call.1} parent=5 // pred_check_branch
        %1046 = sbr.rel (%p1044) target = $region76
      $region75: #{tpu_custom_call.1} parent=5 // pred_region
        %s1047 = ssub.s32 %s23, 2
        // Predicated region
        $region77: #{tpu_custom_call.1} parent=75 // pred_check
          %p1048 = pneg %p225
        $region78: #{tpu_custom_call.1} parent=75 // pred_check_branch
          %1050 = sbr.rel (%p1048) target = $region80
        $region79: #{tpu_custom_call.1} parent=75 // pred_region
          %s1051 = sand.u32 %s210, 1
          %s1052 = scalar_lea.sflag [#allocation5], %s1051
          %s1053 = sand.u32 %s210, 1
          %s1054 = smul.addr %s1053, 16
          %s1055 = scalar_lea.vmem [#allocation11], %s1054
          %1057 = dma.done %s1052, 256
        $region80: #{tpu_custom_call.1} parent=75 // pred_fallthru
          _
      $region76: #{tpu_custom_call.1} parent=5 // pred_fallthru
        _
    $region6: #{tpu_custom_call.1} parent=1 // loop_footer
      %s27 = sadd.s32 1, %s23
    $region7: #{tpu_custom_call.1} parent=1 // loop_footer_branch
      %22 = sbr.rel target = $region3
    $region8: #{tpu_custom_call.1} parent=1 // loop_exit
      _
    %1058 = vsyncpa [#allocation4], 1
    %s1059 = scalar_lea.sflag [#allocation4], 1
    %1060 = vsyncpa %s1059, 1
    %1061 = vsyncpa [#allocation7], 1
    %1062 = vsyncpa [#allocation10], 1
    %1063 = vsyncpa [#allocation5], 1
    %s1064 = scalar_lea.sflag [#allocation5], 1
    %1065 = vsyncpa %s1064, 1

</llo_original>
